<compile_context>
chip_gen: v7x
topology: tpu7x:2x2x1
jax: 0.10.0
libtpu: 0.0.40
codegen_flags: <defaults>
</compile_context>

<pallas_src>
import math

import jax
import jax.numpy as jnp
from jax.experimental import pallas as pl
from jax.experimental.pallas import tpu as pltpu


def _matern32_kernel(params_ref, x1_ref, x2_ref, a2_ref, b2_ref, k_ref):
    # params_ref: SMEM f32[2] = [-sqrt(3)/lengthscale, sigf**2]
    neg_c = params_ref[0]
    s2 = params_ref[1]

    a = x1_ref[...]        # (tn, d)  float32, centered
    b = x2_ref[...]        # (tm, d)  float32, centered

    # Cross term on the MXU: a @ b^T without materializing a transpose.
    cross = jax.lax.dot_general(
        a, b,
        dimension_numbers=(((1,), (1,)), ((), ())),
        preferred_element_type=jnp.float32,
        precision=jax.lax.Precision.HIGHEST,
    )                                                   # (tn, tm)

    # ||a - b||^2 via the norm expansion; norms are hoisted to the wrapper.
    sqrd = a2_ref[...] + b2_ref[...] - 2.0 * cross      # (tn,1)+(1,tm)+(tn,tm)

    nr = jnp.sqrt(jnp.maximum(sqrd, 1e-30)) * neg_c     # nr = -r
    k_ref[...] = jnp.exp(nr) * (1.0 - nr) * s2          # exp(-r)*(1+r)*sigf^2


def _round_up(x, mult):
    return ((x + mult - 1) // mult) * mult


def matern32_forward(x1, x2, rawlen, rawsigf, *, block_n=512, block_m=2048):
    """Pallas implementation of Matern32.forward(x1, x2) (return_grad=False)."""
    x1 = jnp.asarray(x1, jnp.float32)
    x2 = jnp.asarray(x2, jnp.float32)
    if x1.ndim == 1:
        x1 = x1[:, None]
    if x2.ndim == 1:
        x2 = x2[:, None]

    n, d = x1.shape
    m, d2 = x2.shape
    assert d == d2, "x1 and x2 must share the feature dimension"

    # Natural parameters, folded into the two scalars the kernel needs.
    l = jax.nn.softplus(jnp.asarray(rawlen, jnp.float32))
    sigf = jax.nn.softplus(jnp.asarray(rawsigf, jnp.float32))
    neg_c = jnp.reshape(-jnp.float32(math.sqrt(3.0)) / l, ())
    s2 = jnp.reshape(sigf * sigf, ())
    params = jnp.stack([neg_c, s2]).astype(jnp.float32)   # f32[2] -> SMEM

    # Re-center on x1.mean(0) exactly like the reference module.  Algebraically
    # a no-op for the kernel value, numerically it protects the norm expansion
    # from cancellation when the data sits far from the origin.
    mean = jnp.mean(x1, axis=0, keepdims=True)
    x1c = x1 - mean
    x2c = x2 - mean

    # Hoisted squared norms (cheap O((n+m)d) XLA ops, done once).
    a2 = jnp.sum(x1c * x1c, axis=1, keepdims=True)         # (n, 1)
    b2 = jnp.sum(x2c * x2c, axis=1)[None, :]               # (1, m)

    # Tile sizes: sublane-aligned tn, lane-dense tm (multiple of 128).
    tn = min(block_n, _round_up(n, 8))
    tm = min(block_m, _round_up(m, 128))
    # Keep both v7x TensorCores busy: never run a 1x1 grid when n allows a split.
    if pl.cdiv(n, tn) == 1 and pl.cdiv(m, tm) == 1 and n > 8:
        tn = _round_up(pl.cdiv(n, 2), 8)
    grid = (pl.cdiv(n, tn), pl.cdiv(m, tm))

    out = pl.pallas_call(
        _matern32_kernel,
        out_shape=jax.ShapeDtypeStruct((n, m), jnp.float32),
        grid=grid,
        in_specs=[
            pl.BlockSpec(memory_space=pltpu.MemorySpace.SMEM),   # [-c, s2]
            pl.BlockSpec((tn, d), lambda i, j: (i, 0)),          # x1 row tile
            pl.BlockSpec((tm, d), lambda i, j: (j, 0)),          # x2 row tile
            pl.BlockSpec((tn, 1), lambda i, j: (i, 0)),          # ||x1||^2
            pl.BlockSpec((1, tm), lambda i, j: (0, j)),          # ||x2||^2
        ],
        out_specs=pl.BlockSpec((tn, tm), lambda i, j: (i, j)),
        compiler_params=pltpu.CompilerParams(
            dimension_semantics=("parallel", "parallel"),
        ),
    )(params, x1c, x2c, a2, b2)

    return out


def _reference_forward(x1, x2, rawlen, rawsigf):
    """Plain-JAX reference mirroring the PyTorch module for verification."""
    x1 = jnp.asarray(x1, jnp.float32)
    x2 = jnp.asarray(x2, jnp.float32)
    l = jax.nn.softplus(jnp.asarray(rawlen, jnp.float32))
    sigf = jax.nn.softplus(jnp.asarray(rawsigf, jnp.float32))
    mean = x1.mean(0)
    diff = (x1 - mean)[:, None, :] - (x2 - mean)[None, :, :]
    sqrd = jnp.sum(diff ** 2, axis=-1)
    r = jnp.sqrt(jnp.maximum(sqrd, 1e-30)) * (math.sqrt(3.0) / l)
    return jnp.exp(-r) * (r + 1.0) * (sigf ** 2)


if __name__ == "__main__":
    # Deterministic parameter init matching Matern32.reset_parameters(len_init=1.0):
    #   rawlen  = inverse_softplus(1.0) = log(e - 1),  rawsigf = 0.5413
    rawlen = jnp.float32(math.log(math.e - 1.0))
    rawsigf = jnp.float32(0.5413)

    key = jax.random.PRNGKey(0)
    k1, k2, k3, k4 = jax.random.split(key, 4)

    # Test 1: small shapes matching the module's typical use (n=16, m=12, d=3).
    x1 = jax.random.normal(k1, (16, 3), dtype=jnp.float32)
    x2 = jax.random.normal(k2, (12, 3), dtype=jnp.float32)
    k_out = matern32_forward(x1, x2, rawlen, rawsigf)
    jax.block_until_ready(k_out)
    k_ref = _reference_forward(x1, x2, rawlen, rawsigf)
    assert k_out.shape == (16, 12)
    assert jnp.allclose(k_out, k_ref, atol=1e-4, rtol=1e-4)

    # Test 2: exercises the multi-block grid and partial (masked) edge blocks.
    y1 = jax.random.normal(k3, (300, 3), dtype=jnp.float32)
    y2 = jax.random.normal(k4, (700, 3), dtype=jnp.float32)
    k_out2 = matern32_forward(y1, y2, rawlen, rawsigf)
    jax.block_until_ready(k_out2)
    k_ref2 = _reference_forward(y1, y2, rawlen, rawsigf)
    assert k_out2.shape == (300, 700)
    assert jnp.allclose(k_out2, k_ref2, atol=1e-4, rtol=1e-4)
    assert bool(jnp.all(jnp.isfinite(k_out2)))

    print("KERNEL_OK")
</pallas_src>

<mosaic_0001>
module attributes {stable_mosaic.version = 11 : i64} {
  func.func @_matern32_kernel(%arg0: i32, %arg1: i32, %arg2: memref<2xf32, #tpu.memory_space<smem>>, %arg3: memref<8x3xf32, #tpu.memory_space<vmem>>, %arg4: memref<128x3xf32, #tpu.memory_space<vmem>>, %arg5: memref<8x1xf32, #tpu.memory_space<vmem>>, %arg6: memref<1x128xf32, #tpu.memory_space<vmem>>, %arg7: memref<8x128xf32, #tpu.memory_space<vmem>>) attributes {dimension_semantics = [#tpu.dimension_semantics<parallel>, #tpu.dimension_semantics<parallel>], iteration_bounds = array<i64: 2, 1>, scalar_prefetch = 0 : i64, scratch_operands = 0 : i64, tpu.core_type = #tpu.core_type<tc>, window_params = [{transform_indices = @transform_0, window_bounds = array<i64: 2>}, {transform_indices = @transform_1, window_bounds = array<i64: 8, 3>}, {transform_indices = @transform_2, window_bounds = array<i64: 128, 3>}, {transform_indices = @transform_3, window_bounds = array<i64: 8, 1>}, {transform_indices = @transform_4, window_bounds = array<i64: 1, 128>}, {transform_indices = @transform_5, window_bounds = array<i64: 8, 128>}]} {
    %c0 = arith.constant 0 : index
    %0 = memref.load %arg2[%c0] : memref<2xf32, #tpu.memory_space<smem>>
    %c1 = arith.constant 1 : index
    %1 = memref.load %arg2[%c1] : memref<2xf32, #tpu.memory_space<smem>>
    %c0_0 = arith.constant 0 : index
    %c0_1 = arith.constant 0 : index
    %2 = vector.load %arg3[%c0_0, %c0_1] : memref<8x3xf32, #tpu.memory_space<vmem>>, vector<8x3xf32>
    %c0_2 = arith.constant 0 : index
    %c0_3 = arith.constant 0 : index
    %3 = vector.load %arg4[%c0_2, %c0_3] : memref<128x3xf32, #tpu.memory_space<vmem>>, vector<128x3xf32>
    %cst = arith.constant dense<0.000000e+00> : vector<8x128xf32>
    %4 = tpu.matmul %2, %3, %cst {dimension_numbers = #tpu.dot_dimension_numbers<[1], [1], [0], [0], [0, 0, 1, 0], [], []>, precision = #tpu.contract_precision<fp32>} : vector<8x3xf32>, vector<128x3xf32>, vector<8x128xf32> -> vector<8x128xf32>
    %c0_4 = arith.constant 0 : index
    %c0_5 = arith.constant 0 : index
    %5 = vector.load %arg5[%c0_4, %c0_5] : memref<8x1xf32, #tpu.memory_space<vmem>>, vector<8x1xf32>
    %c0_6 = arith.constant 0 : index
    %c0_7 = arith.constant 0 : index
    %6 = vector.load %arg6[%c0_6, %c0_7] : memref<1x128xf32, #tpu.memory_space<vmem>>, vector<1x128xf32>
    %7 = vector.broadcast %5 : vector<8x1xf32> to vector<8x128xf32>
    %8 = vector.broadcast %6 : vector<1x128xf32> to vector<8x128xf32>
    %9 = arith.addf %7, %8 : vector<8x128xf32>
    %cst_8 = arith.constant 2.000000e+00 : f32
    %10 = vector.broadcast %cst_8 : f32 to vector<8x128xf32>
    %11 = arith.mulf %10, %4 : vector<8x128xf32>
    %12 = arith.subf %9, %11 : vector<8x128xf32>
    %cst_9 = arith.constant 1.000000e-30 : f32
    %13 = vector.broadcast %cst_9 : f32 to vector<8x128xf32>
    %14 = arith.maximumf %12, %13 : vector<8x128xf32>
    %15 = math.sqrt %14 : vector<8x128xf32>
    %16 = vector.broadcast %0 : f32 to vector<8x128xf32>
    %17 = arith.mulf %15, %16 : vector<8x128xf32>
    %18 = math.exp %17 : vector<8x128xf32>
    %cst_10 = arith.constant 1.000000e+00 : f32
    %19 = vector.broadcast %cst_10 : f32 to vector<8x128xf32>
    %20 = arith.subf %19, %17 : vector<8x128xf32>
    %21 = arith.mulf %18, %20 : vector<8x128xf32>
    %22 = vector.broadcast %1 : f32 to vector<8x128xf32>
    %23 = arith.mulf %21, %22 : vector<8x128xf32>
    %c0_11 = arith.constant 0 : index
    %c0_12 = arith.constant 0 : index
    %24 = vector.load %arg7[%c0_11, %c0_12] : memref<8x128xf32, #tpu.memory_space<vmem>>, vector<8x128xf32>
    tpu.vector_store %arg7[%c0_11, %c0_12], %23 {strides = array<i32>} : memref<8x128xf32, #tpu.memory_space<vmem>>, vector<8x128xf32>,
    return
  }
  func.func @transform_0(%arg0: i32, %arg1: i32) -> i32 {
    %c0_i32 = arith.constant 0 : i32
    %c0_i32_0 = arith.constant 0 : i32
    return %c0_i32 : i32
  }
  func.func @transform_1(%arg0: i32, %arg1: i32) -> (i32, i32) {
    %c0_i32 = arith.constant 0 : i32
    %c0_i32_0 = arith.constant 0 : i32
    return %arg0, %c0_i32 : i32, i32
  }
  func.func @transform_2(%arg0: i32, %arg1: i32) -> (i32, i32) {
    %c0_i32 = arith.constant 0 : i32
    %c0_i32_0 = arith.constant 0 : i32
    return %arg1, %c0_i32 : i32, i32
  }
  func.func @transform_3(%arg0: i32, %arg1: i32) -> (i32, i32) {
    %c0_i32 = arith.constant 0 : i32
    %c0_i32_0 = arith.constant 0 : i32
    return %arg0, %c0_i32 : i32, i32
  }
  func.func @transform_4(%arg0: i32, %arg1: i32) -> (i32, i32) {
    %c0_i32 = arith.constant 0 : i32
    %c0_i32_0 = arith.constant 0 : i32
    return %c0_i32, %arg1 : i32, i32
  }
  func.func @transform_5(%arg0: i32, %arg1: i32) -> (i32, i32) {
    %c0_i32 = arith.constant 0 : i32
    return %arg0, %arg1 : i32, i32
  }
}

</mosaic_0001>

<llo_original>
// kernel: tpu_custom_call.1
$region0: #{tpu_custom_call.1}
  #allocation0 [shape = 'u32[]', space=smem, size = 0x4, offset = 0x4, fixed_abs, tag = 'smem constant byte address 0x4 - core index']
  #allocation1 [shape = 'u32[144,128]{1,0:T(1,128)}', space=vmem, size = 0x12000, scoped, tag = 'internal scratch']
  %s0 = inlined_call_operand.vmem [shape: f32[2], index: 0, kind: input, shape index: {}]
  %s1 = inlined_call_operand.vmem [shape: f32[16,3], index: 1, kind: input, shape index: {}]
  %s2 = inlined_call_operand.vmem [shape: f32[12,3], index: 2, kind: input, shape index: {}]
  %s3 = inlined_call_operand.vmem [shape: f32[16,1], index: 3, kind: input, shape index: {}]
  %s4 = inlined_call_operand.vmem [shape: f32[1,12], index: 4, kind: input, shape index: {}]
  %s5 = inlined_call_operand.hbm [shape: f32[16,12], index: 5, kind: output, shape index: {}]
  %s6 = sld [smem:[#allocation0]]
  $region57: #{tpu_custom_call.1} parent=0
    _
  %s8 = ssub.s32 1, %s6
  %s9 = scalar_select 0, %s8, %s6
  $region1: #{tpu_custom_call.1} parent=0
    #allocation2 [shape = 'u8[512]{0}', space=smem, size = 0x200, scoped, tag = 'input window, operand 0, single buffered']
    #allocation3 [shape = 's32[2]{0}', space=sflag, size = 0x8, scoped, tag = 'scoped memory for tpu_custom_call.1']
    #allocation4 [shape = 's32[2]{0}', space=sflag, size = 0x8, scoped, tag = 'scoped memory for tpu_custom_call.1']
    #allocation5 [shape = 'u8[8192]{0}', space=vmem, size = 0x2000, scoped, tag = 'output window, operand 0']
    %10 = vsyncpa [#allocation4], 0
    %11 = vsyncpa [#allocation3], 0
    %s12 = scalar_lea.sflag [#allocation3], 1
    %13 = vsyncpa %s12, 0
    loop: start=0, step=1, limit=4
    $region2: #{tpu_custom_call.1} parent=1 // loop_pre_header
      _
    $region3: #{tpu_custom_call.1} parent=1 // loop_header
      %s15 = sphi 0, %s19
      %p16 = scmp.ge.s32.totalorder %s15, 4
      %s22 = sphi 0, %s34
      %s23 = sphi 0, %s30
      %s24 = sphi 0, %s22
      %s25 = sphi 0, %s23
      %s26 = sphi 0, %s24
      %s27 = sphi 0, %s25
      %s35 = sphi 0, %s35
      %s37 = sphi 0, %s35
      %s38 = sphi 0, %s37
      %s52 = sphi 0, %s38
      %s58 = sphi 0, %s60
      %s61 = sphi 0, %s58
      %s62 = sphi 0, %s61
      %s78 = sphi 0, %s62
      %s84 = sphi 0, %s86
      %s87 = sphi 0, %s84
      %s88 = sphi 0, %s87
      %s104 = sphi 0, %s88
      %s110 = sphi 0, %s112
      %s113 = sphi 0, %s110
      %s114 = sphi 0, %s113
      %s130 = sphi 0, %s114
      %s136 = sphi 0, %s138
      %s139 = sphi 0, %s136
      %s140 = sphi 0, %s139
      %s156 = sphi 0, %s140
      %s164 = sphi 0, %s166
      %s167 = sphi 0, %s164
      %s168 = sphi 0, %s167
      %s184 = sphi 0, %s168
    $region4: #{tpu_custom_call.1} parent=1 // loop_header_branch
      %18 = sbr.rel (%p16) target = $region8
    $region5: #{tpu_custom_call.1} parent=1 // loop_body
      %s20 = ssub.s32 %s15, 1
      %s21 = ssub.s32 %s15, 2
      %s28 = sadd.s32 1, %s23
      %p29 = scmp.ge.s32.totalorder %s28, 1
      %s30 = scalar_select %p29, 0, %s28
      %s31 = sadd.s32 1, %s22
      %s32 = scalar_select %p29, %s31, %s22
      %p33 = scmp.ge.s32.totalorder %s32, 2
      %s34 = scalar_select %p33, 0, %s32
      %s36 = sadd.s32 %s35, 1
      %p39 = scmp.eq.s32.totalorder %s15, 1
      %p40 = scmp.ne.s32.totalorder %s35, %s37
      %p41 = scmp.eq.s32.totalorder %s15, 0
      %p42 = por %p40, %p41
      %p43 = scmp.ne.s32.totalorder %s35, %s37
      %p44 = scmp.eq.s32.totalorder %s20, 1
      %p45 = por %p43, %p44
      %p46 = scmp.ne.s32.totalorder %s37, %s38
      %p47 = scmp.eq.s32.totalorder %s20, 0
      %p48 = por %p46, %p47
      %p49 = scmp.ne.s32.totalorder %s37, %s38
      %p50 = scmp.eq.s32.totalorder %s21, 1
      %p51 = por %p49, %p50
      %p53 = scmp.ne.s32.totalorder %s38, %s52
      %p54 = scmp.eq.s32.totalorder %s21, 0
      %p55 = por %p53, %p54
      %s56 = ssub.s32 %s22, %s34
      %p57 = scmp.eq.s32.totalorder %s56, 0
      %s59 = sadd.s32 %s58, 1
      %s60 = scalar_select %p57, %s58, %s59
      %p63 = pneg %p57
      %p64 = scmp.eq.s32.totalorder %s15, 1
      %p65 = por %p63, %p64
      %p66 = scmp.ne.s32.totalorder %s58, %s61
      %p67 = scmp.eq.s32.totalorder %s15, 0
      %p68 = por %p66, %p67
      %p69 = scmp.ne.s32.totalorder %s58, %s61
      %p70 = scmp.eq.s32.totalorder %s20, 1
      %p71 = por %p69, %p70
      %p72 = scmp.ne.s32.totalorder %s61, %s62
      %p73 = scmp.eq.s32.totalorder %s20, 0
      %p74 = por %p72, %p73
      %p75 = scmp.ne.s32.totalorder %s61, %s62
      %p76 = scmp.eq.s32.totalorder %s21, 1
      %p77 = por %p75, %p76
      %p79 = scmp.ne.s32.totalorder %s62, %s78
      %p80 = scmp.eq.s32.totalorder %s21, 0
      %p81 = por %p79, %p80
      %s82 = ssub.s32 %s23, %s30
      %p83 = scmp.eq.s32.totalorder %s82, 0
      %s85 = sadd.s32 %s84, 1
      %s86 = scalar_select %p83, %s84, %s85
      %p89 = pneg %p83
      %p90 = scmp.eq.s32.totalorder %s15, 1
      %p91 = por %p89, %p90
      %p92 = scmp.ne.s32.totalorder %s84, %s87
      %p93 = scmp.eq.s32.totalorder %s15, 0
      %p94 = por %p92, %p93
      %p95 = scmp.ne.s32.totalorder %s84, %s87
      %p96 = scmp.eq.s32.totalorder %s20, 1
      %p97 = por %p95, %p96
      %p98 = scmp.ne.s32.totalorder %s87, %s88
      %p99 = scmp.eq.s32.totalorder %s20, 0
      %p100 = por %p98, %p99
      %p101 = scmp.ne.s32.totalorder %s87, %s88
      %p102 = scmp.eq.s32.totalorder %s21, 1
      %p103 = por %p101, %p102
      %p105 = scmp.ne.s32.totalorder %s88, %s104
      %p106 = scmp.eq.s32.totalorder %s21, 0
      %p107 = por %p105, %p106
      %s108 = ssub.s32 %s22, %s34
      %p109 = scmp.eq.s32.totalorder %s108, 0
      %s111 = sadd.s32 %s110, 1
      %s112 = scalar_select %p109, %s110, %s111
      %p115 = pneg %p109
      %p116 = scmp.eq.s32.totalorder %s15, 1
      %p117 = por %p115, %p116
      %p118 = scmp.ne.s32.totalorder %s110, %s113
      %p119 = scmp.eq.s32.totalorder %s15, 0
      %p120 = por %p118, %p119
      %p121 = scmp.ne.s32.totalorder %s110, %s113
      %p122 = scmp.eq.s32.totalorder %s20, 1
      %p123 = por %p121, %p122
      %p124 = scmp.ne.s32.totalorder %s113, %s114
      %p125 = scmp.eq.s32.totalorder %s20, 0
      %p126 = por %p124, %p125
      %p127 = scmp.ne.s32.totalorder %s113, %s114
      %p128 = scmp.eq.s32.totalorder %s21, 1
      %p129 = por %p127, %p128
      %p131 = scmp.ne.s32.totalorder %s114, %s130
      %p132 = scmp.eq.s32.totalorder %s21, 0
      %p133 = por %p131, %p132
      %s134 = ssub.s32 %s23, %s30
      %p135 = scmp.eq.s32.totalorder %s134, 0
      %s137 = sadd.s32 %s136, 1
      %s138 = scalar_select %p135, %s136, %s137
      %p141 = pneg %p135
      %p142 = scmp.eq.s32.totalorder %s15, 1
      %p143 = por %p141, %p142
      %p144 = scmp.ne.s32.totalorder %s136, %s139
      %p145 = scmp.eq.s32.totalorder %s15, 0
      %p146 = por %p144, %p145
      %p147 = scmp.ne.s32.totalorder %s136, %s139
      %p148 = scmp.eq.s32.totalorder %s20, 1
      %p149 = por %p147, %p148
      %p150 = scmp.ne.s32.totalorder %s139, %s140
      %p151 = scmp.eq.s32.totalorder %s20, 0
      %p152 = por %p150, %p151
      %p153 = scmp.ne.s32.totalorder %s139, %s140
      %p154 = scmp.eq.s32.totalorder %s21, 1
      %p155 = por %p153, %p154
      %p157 = scmp.ne.s32.totalorder %s140, %s156
      %p158 = scmp.eq.s32.totalorder %s21, 0
      %p159 = por %p157, %p158
      %s160 = ssub.s32 %s22, %s34
      %s161 = ssub.s32 %s23, %s30
      %s162 = sor.u32 %s160, %s161
      %p163 = scmp.eq.s32.totalorder %s162, 0
      %s165 = sadd.s32 %s164, 1
      %s166 = scalar_select %p163, %s164, %s165
      %p169 = pneg %p163
      %p170 = scmp.eq.s32.totalorder %s15, 1
      %p171 = por %p169, %p170
      %p172 = scmp.ne.s32.totalorder %s164, %s167
      %p173 = scmp.eq.s32.totalorder %s15, 0
      %p174 = por %p172, %p173
      %p175 = scmp.ne.s32.totalorder %s164, %s167
      %p176 = scmp.eq.s32.totalorder %s20, 1
      %p177 = por %p175, %p176
      %p178 = scmp.ne.s32.totalorder %s167, %s168
      %p179 = scmp.eq.s32.totalorder %s20, 0
      %p180 = por %p178, %p179
      %p181 = scmp.ne.s32.totalorder %s167, %s168
      %p182 = scmp.eq.s32.totalorder %s21, 1
      %p183 = por %p181, %p182
      %p185 = scmp.ne.s32.totalorder %s168, %s184
      %p186 = scmp.eq.s32.totalorder %s21, 0
      %p187 = por %p185, %p186
      %p188 = scmp.le.s32.totalorder 1, %s15
      %p189 = scmp.lt.s32.totalorder %s15, 3
      %p190 = pnand %p188, %p189
      %p191 = pneg %p190
      // Predicated region
      $region9: #{tpu_custom_call.1} parent=5 // pred_check
        _
      $region10: #{tpu_custom_call.1} parent=5 // pred_check_branch
        %193 = sbr.rel (%p190) target = $region12
      $region11: #{tpu_custom_call.1} parent=5 // pred_region
        %s194 = ssub.s32 %s15, 1
        // Predicated region
        $region13: #{tpu_custom_call.1} parent=11 // pred_check
          %p195 = pneg %p48
        $region14: #{tpu_custom_call.1} parent=11 // pred_check_branch
          %197 = sbr.rel (%p195) target = $region16
        $region15: #{tpu_custom_call.1} parent=11 // pred_region
          %s199 = ssub.s32 16, 16
          %200 = vsyncadd [#allocation4], %s199
          %s202 = sshll.u32 %s0, 4
          %s203 = int_to_ptr.vmem [resolvable:$true] %s202
          %205 = dma.vmem_to_smem %s203, 16, [#allocation2], [#allocation4]
        $region16: #{tpu_custom_call.1} parent=11 // pred_fallthru
          _
        // Predicated region
        $region17: #{tpu_custom_call.1} parent=11 // pred_check
          %p206 = pneg %p100
        $region18: #{tpu_custom_call.1} parent=11 // pred_check_branch
          %208 = sbr.rel (%p206) target = $region20
        $region19: #{tpu_custom_call.1} parent=11 // pred_region
          %s209 = smul.u32 16, %s25
          %s210 = ssub.s32 2, %s209
          %s211 = smul.u32 128, %s210
          %p212 = scmp.lt.s32.totalorder %s209, 1
          %s213 = scalar_select %p212, %s209, 1
          %s214 = smul.addr %s213, 8
          %s215 = scalar_lea.vmem %s2, %s214
          %s216 = smul.u32 16, %s25
          %s217 = ssub.s32 2, %s216
          %s218 = smul.u32 128, %s217
        $region20: #{tpu_custom_call.1} parent=11 // pred_fallthru
          _
        // Predicated region
        $region21: #{tpu_custom_call.1} parent=11 // pred_check
          %p219 = pneg %p152
        $region22: #{tpu_custom_call.1} parent=11 // pred_check_branch
          %221 = sbr.rel (%p219) target = $region24
        $region23: #{tpu_custom_call.1} parent=11 // pred_region
          %p222 = scmp.lt.s32.totalorder %s25, 0
          %s223 = scalar_select %p222, %s25, 0
          %s224 = scalar_lea.vmem %s4, %s223
        $region24: #{tpu_custom_call.1} parent=11 // pred_fallthru
          _
      $region12: #{tpu_custom_call.1} parent=5 // pred_fallthru
        _
      %p225 = scmp.lt.s32.totalorder %s15, 2
      // Predicated region
      $region25: #{tpu_custom_call.1} parent=5 // pred_check
        %p226 = pneg %p225
      $region26: #{tpu_custom_call.1} parent=5 // pred_check_branch
        %228 = sbr.rel (%p226) target = $region28
      $region27: #{tpu_custom_call.1} parent=5 // pred_region
        // Predicated region
        $region29: #{tpu_custom_call.1} parent=27 // pred_check
          %p229 = pneg %p68
        $region30: #{tpu_custom_call.1} parent=27 // pred_check_branch
          %231 = sbr.rel (%p229) target = $region32
        $region31: #{tpu_custom_call.1} parent=27 // pred_region
          %p232 = scmp.lt.s32.totalorder %s22, 1
          %s233 = scalar_select %p232, %s22, 1
          %s234 = smul.addr %s233, 8
          %s235 = scalar_lea.vmem %s1, %s234
        $region32: #{tpu_custom_call.1} parent=27 // pred_fallthru
          _
        // Predicated region
        $region33: #{tpu_custom_call.1} parent=27 // pred_check
          %p236 = pneg %p120
        $region34: #{tpu_custom_call.1} parent=27 // pred_check_branch
          %238 = sbr.rel (%p236) target = $region36
        $region35: #{tpu_custom_call.1} parent=27 // pred_region
          %p239 = scmp.lt.s32.totalorder %s22, 1
          %s240 = scalar_select %p239, %s22, 1
          %s241 = smul.addr %s240, 8
          %s242 = scalar_lea.vmem %s3, %s241
        $region36: #{tpu_custom_call.1} parent=27 // pred_fallthru
          _
      $region28: #{tpu_custom_call.1} parent=5 // pred_fallthru
        _
      %p243 = scmp.le.s32.totalorder 1, %s15
      %p244 = scmp.lt.s32.totalorder %s15, 3
      %p245 = pnand %p243, %p244
      %p246 = pneg %p245
      // Predicated region
      $region37: #{tpu_custom_call.1} parent=5 // pred_check
        _
      $region38: #{tpu_custom_call.1} parent=5 // pred_check_branch
        %248 = sbr.rel (%p245) target = $region40
      $region39: #{tpu_custom_call.1} parent=5 // pred_region
        %s249 = ssub.s32 %s15, 1
        // Predicated region
        $region41: #{tpu_custom_call.1} parent=39 // pred_check
          %p250 = pneg %p48
        $region42: #{tpu_custom_call.1} parent=39 // pred_check_branch
          %252 = sbr.rel (%p250) target = $region44
        $region43: #{tpu_custom_call.1} parent=39 // pred_region
          %253 = dma.done [#allocation4], 16
        $region44: #{tpu_custom_call.1} parent=39 // pred_fallthru
          _
        %254 = sfence
        %p255 = pneg %p48
        %p256 = pneg %p45
        %p257 = scmp.lt.s32.totalorder %s24, 1
        %s258 = scalar_select %p257, %s24, 1
        %s259 = smul.addr %s258, 8
        %s260 = scalar_lea.vmem %s1, %s259
        %p261 = pneg %p74
        %p262 = pneg %p71
        %s263 = smul.u32 16, %s25
        %s264 = ssub.s32 2, %s263
        %s265 = smul.u32 128, %s264
        %p266 = scmp.lt.s32.totalorder %s263, 1
        %s267 = scalar_select %p266, %s263, 1
        %s268 = smul.addr %s267, 8
        %s269 = scalar_lea.vmem %s2, %s268
        %p270 = pneg %p100
        %p271 = pneg %p97
        %p272 = scmp.lt.s32.totalorder %s24, 1
        %s273 = scalar_select %p272, %s24, 1
        %s274 = smul.addr %s273, 8
        %s275 = scalar_lea.vmem %s3, %s274
        %p276 = pneg %p126
        %p277 = pneg %p123
        %p278 = scmp.lt.s32.totalorder %s25, 0
        %s279 = scalar_select %p278, %s25, 0
        %s280 = scalar_lea.vmem %s4, %s279
        %p281 = pneg %p152
        %p282 = pneg %p149
        %p283 = pneg %p180
        %p284 = pneg %p177
        %s285 = sand.u32 %s167, 1
        %s286 = scalar_lea.sflag [#allocation3], %s285
        %s287 = sand.u32 %s167, 1
        %s288 = smul.addr %s287, 8
        %s289 = scalar_lea.vmem [#allocation5], %s288
        %p290 = scmp.lt.s32.totalorder %s24, 1
        %s291 = scalar_select %p290, %s24, 1
        %s292 = smul.addr %s291, 8
        %s293 = scalar_lea.vmem %s1, %s292
        %s294 = smul.u32 16, %s25
        %s295 = ssub.s32 2, %s294
        %s296 = smul.u32 128, %s295
        %p297 = scmp.lt.s32.totalorder %s294, 1
        %s298 = scalar_select %p297, %s294, 1
        %s299 = smul.addr %s298, 8
        %s300 = scalar_lea.vmem %s2, %s299
        %s301 = smul.u32 16, %s25
        %s302 = ssub.s32 2, %s301
        %s303 = smul.u32 128, %s302
        %p304 = scmp.lt.s32.totalorder %s24, 1
        %s305 = scalar_select %p304, %s24, 1
        %s306 = smul.addr %s305, 8
        %s307 = scalar_lea.vmem %s3, %s306
        %p308 = scmp.lt.s32.totalorder %s25, 0
        %s309 = scalar_select %p308, %s25, 0
        %s310 = scalar_lea.vmem %s4, %s309
        %s311 = sld [smem:[#allocation2]]
        %s312 = sld [smem:[#allocation2 + $0x1]]
        %v313 = vld [vmem:[%s293] sm:$0xff]
        %v314 = vld [vmem:[%s300] sm:$0xff]
        %v315 = vld [vmem:[%s300 + $0x8] sm:$0xff]
        %v316 = vld [vmem:[%s300 + $0x10] sm:$0xff]
        %v317 = vld [vmem:[%s300 + $0x18] sm:$0xff]
        %v318 = vld [vmem:[%s300 + $0x20] sm:$0xff]
        %v319 = vld [vmem:[%s300 + $0x28] sm:$0xff]
        %v320 = vld [vmem:[%s300 + $0x30] sm:$0xff]
        %v321 = vld [vmem:[%s300 + $0x38] sm:$0xff]
        %v322 = vld [vmem:[%s300 + $0x40] sm:$0xff]
        %v323 = vld [vmem:[%s300 + $0x48] sm:$0xff]
        %v324 = vld [vmem:[%s300 + $0x50] sm:$0xff]
        %v325 = vld [vmem:[%s300 + $0x58] sm:$0xff]
        %v326 = vld [vmem:[%s300 + $0x60] sm:$0xff]
        %v327 = vld [vmem:[%s300 + $0x68] sm:$0xff]
        %v328 = vld [vmem:[%s300 + $0x70] sm:$0xff]
        %v329 = vld [vmem:[%s300 + $0x78] sm:$0xff]
        %vm330 = vcmask 23552
        %v332 = vsel %vm330, %v313, 0
        %v335 = vsel %vm330, %v314, 0
        %v338 = vsel %vm330, %v315, 0
        %v341 = vsel %vm330, %v316, 0
        %v344 = vsel %vm330, %v317, 0
        %v347 = vsel %vm330, %v318, 0
        %v350 = vsel %vm330, %v319, 0
        %v353 = vsel %vm330, %v320, 0
        %v356 = vsel %vm330, %v321, 0
        %v359 = vsel %vm330, %v322, 0
        %v362 = vsel %vm330, %v323, 0
        %v365 = vsel %vm330, %v324, 0
        %v368 = vsel %vm330, %v325, 0
        %v371 = vsel %vm330, %v326, 0
        %v374 = vsel %vm330, %v327, 0
        %v377 = vsel %vm330, %v328, 0
        %v380 = vsel %vm330, %v329, 0
        %382 = vmatprep.subr.mxu0 0.0
        %v383 = vand.u32 %v335, 4294901760
        %384 = vmatpush1.xpose.msra.mxu0 %v383
        %385 = vmatprep.subr.mxu0 0.0
        %v386 = vand.u32 %v338, 4294901760
        %387 = vmatpush1.xpose.msra.mxu0 %v386
        %388 = vmatprep.subr.mxu0 0.0
        %v389 = vand.u32 %v341, 4294901760
        %390 = vmatpush1.xpose.msra.mxu0 %v389
        %391 = vmatprep.subr.mxu0 0.0
        %v392 = vand.u32 %v344, 4294901760
        %393 = vmatpush1.xpose.msra.mxu0 %v392
        %394 = vmatprep.subr.mxu0 0.0
        %v395 = vand.u32 %v347, 4294901760
        %396 = vmatpush1.xpose.msra.mxu0 %v395
        %397 = vmatprep.subr.mxu0 0.0
        %v398 = vand.u32 %v350, 4294901760
        %399 = vmatpush1.xpose.msra.mxu0 %v398
        %400 = vmatprep.subr.mxu0 0.0
        %v401 = vand.u32 %v353, 4294901760
        %402 = vmatpush1.xpose.msra.mxu0 %v401
        %403 = vmatprep.subr.mxu0 0.0
        %v404 = vand.u32 %v356, 4294901760
        %405 = vmatpush1.xpose.msra.mxu0 %v404
        %406 = vmatprep.subr.mxu0 0.0
        %v407 = vand.u32 %v359, 4294901760
        %408 = vmatpush1.xpose.msra.mxu0 %v407
        %409 = vmatprep.subr.mxu0 0.0
        %v410 = vand.u32 %v362, 4294901760
        %411 = vmatpush1.xpose.msra.mxu0 %v410
        %412 = vmatprep.subr.mxu0 0.0
        %v413 = vand.u32 %v365, 4294901760
        %414 = vmatpush1.xpose.msra.mxu0 %v413
        %415 = vmatprep.subr.mxu0 0.0
        %v416 = vand.u32 %v368, 4294901760
        %417 = vmatpush1.xpose.msra.mxu0 %v416
        %418 = vmatprep.subr.mxu0 0.0
        %v419 = vand.u32 %v371, 4294901760
        %420 = vmatpush1.xpose.msra.mxu0 %v419
        %421 = vmatprep.subr.mxu0 0.0
        %v422 = vand.u32 %v374, 4294901760
        %423 = vmatpush1.xpose.msra.mxu0 %v422
        %424 = vmatprep.subr.mxu0 0.0
        %v425 = vand.u32 %v377, 4294901760
        %426 = vmatpush1.xpose.msra.mxu0 %v425
        %427 = vmatprep.subr.mxu0 0.0
        %v428 = vand.u32 %v380, 4294901760
        %429 = vmatpush1.xpose.msra.mxu0 %v428
        %430 = vmatprep.subr.mxu0 0.0
        %431 = vmatpush1.xpose.msra.mxu0 0.0
        %432 = vmatprep.subr.mxu0 0.0
        %433 = vmatpush1.xpose.msra.mxu0 0.0
        %434 = vmatprep.subr.mxu0 0.0
        %435 = vmatpush1.xpose.msra.mxu0 0.0
        %436 = vmatprep.subr.mxu0 0.0
        %437 = vmatpush1.xpose.msra.mxu0 0.0
        %438 = vmatprep.subr.mxu0 0.0
        %439 = vmatpush1.xpose.msra.mxu0 0.0
        %440 = vmatprep.subr.mxu0 0.0
        %441 = vmatpush1.xpose.msra.mxu0 0.0
        %442 = vmatprep.subr.mxu0 0.0
        %443 = vmatpush1.xpose.msra.mxu0 0.0
        %444 = vmatprep.subr.mxu0 0.0
        %445 = vmatpush1.xpose.msra.mxu0 0.0
        %446 = vmatprep.subr.mxu0 0.0
        %447 = vmatpush1.xpose.msra.mxu0 0.0
        %448 = vmatprep.subr.mxu0 0.0
        %449 = vmatpush1.xpose.msra.mxu0 0.0
        %450 = vmatprep.subr.mxu0 0.0
        %451 = vmatpush1.xpose.msra.mxu0 0.0
        %452 = vmatprep.subr.mxu0 0.0
        %453 = vmatpush1.xpose.msra.mxu0 0.0
        %454 = vmatprep.subr.mxu0 0.0
        %455 = vmatpush1.xpose.msra.mxu0 0.0
        %456 = vmatprep.subr.mxu0 0.0
        %457 = vmatpush1.xpose.msra.mxu0 0.0
        %458 = vmatprep.subr.mxu0 0.0
        %459 = vmatpush1.xpose.msra.mxu0 0.0
        %460 = vmatprep.subr.mxu0 0.0
        %461 = vmatpush1.xpose.msra.mxu0 0.0
        %462 = vmatprep.mubr.f32.mxu0 0.0
        %v463 = vand.u32 %v332, 4294901760
        %v464 = vsub.f32 %v332, %v463
        %v465 = vand.u32 %v464, 4294901760
        %v466 = vsub.f32 %v464, %v465
        %v467 = vand.u32 %v466, 4294901760
        %468 = vmatmul.mubr.f32.gmra.mrb[0].mxu0 %v467
        %v469 = vpop.f32.mrb[0].mxu0
        %v470 = vadd.f32 0.0, %v469
        %v471 = vpop.f32.mrb[0].mxu0
        %472 = vdwg.mxu0
        %473 = vmatprep.subr.mxu0 0.0
        %v474 = vand.u32 %v335, 4294901760
        %v475 = vsub.f32 %v335, %v474
        %v476 = vand.u32 %v475, 4294901760
        %v477 = vsub.f32 %v475, %v476
        %v478 = vand.u32 %v477, 4294901760
        %479 = vmatpush1.xpose.msra.mxu0 %v478
        %480 = vmatprep.subr.mxu0 0.0
        %v481 = vand.u32 %v338, 4294901760
        %v482 = vsub.f32 %v338, %v481
        %v483 = vand.u32 %v482, 4294901760
        %v484 = vsub.f32 %v482, %v483
        %v485 = vand.u32 %v484, 4294901760
        %486 = vmatpush1.xpose.msra.mxu0 %v485
        %487 = vmatprep.subr.mxu0 0.0
        %v488 = vand.u32 %v341, 4294901760
        %v489 = vsub.f32 %v341, %v488
        %v490 = vand.u32 %v489, 4294901760
        %v491 = vsub.f32 %v489, %v490
        %v492 = vand.u32 %v491, 4294901760
        %493 = vmatpush1.xpose.msra.mxu0 %v492
        %494 = vmatprep.subr.mxu0 0.0
        %v495 = vand.u32 %v344, 4294901760
        %v496 = vsub.f32 %v344, %v495
        %v497 = vand.u32 %v496, 4294901760
        %v498 = vsub.f32 %v496, %v497
        %v499 = vand.u32 %v498, 4294901760
        %500 = vmatpush1.xpose.msra.mxu0 %v499
        %501 = vmatprep.subr.mxu0 0.0
        %v502 = vand.u32 %v347, 4294901760
        %v503 = vsub.f32 %v347, %v502
        %v504 = vand.u32 %v503, 4294901760
        %v505 = vsub.f32 %v503, %v504
        %v506 = vand.u32 %v505, 4294901760
        %507 = vmatpush1.xpose.msra.mxu0 %v506
        %508 = vmatprep.subr.mxu0 0.0
        %v509 = vand.u32 %v350, 4294901760
        %v510 = vsub.f32 %v350, %v509
        %v511 = vand.u32 %v510, 4294901760
        %v512 = vsub.f32 %v510, %v511
        %v513 = vand.u32 %v512, 4294901760
        %514 = vmatpush1.xpose.msra.mxu0 %v513
        %515 = vmatprep.subr.mxu0 0.0
        %v516 = vand.u32 %v353, 4294901760
        %v517 = vsub.f32 %v353, %v516
        %v518 = vand.u32 %v517, 4294901760
        %v519 = vsub.f32 %v517, %v518
        %v520 = vand.u32 %v519, 4294901760
        %521 = vmatpush1.xpose.msra.mxu0 %v520
        %522 = vmatprep.subr.mxu0 0.0
        %v523 = vand.u32 %v356, 4294901760
        %v524 = vsub.f32 %v356, %v523
        %v525 = vand.u32 %v524, 4294901760
        %v526 = vsub.f32 %v524, %v525
        %v527 = vand.u32 %v526, 4294901760
        %528 = vmatpush1.xpose.msra.mxu0 %v527
        %529 = vmatprep.subr.mxu0 0.0
        %v530 = vand.u32 %v359, 4294901760
        %v531 = vsub.f32 %v359, %v530
        %v532 = vand.u32 %v531, 4294901760
        %v533 = vsub.f32 %v531, %v532
        %v534 = vand.u32 %v533, 4294901760
        %535 = vmatpush1.xpose.msra.mxu0 %v534
        %536 = vmatprep.subr.mxu0 0.0
        %v537 = vand.u32 %v362, 4294901760
        %v538 = vsub.f32 %v362, %v537
        %v539 = vand.u32 %v538, 4294901760
        %v540 = vsub.f32 %v538, %v539
        %v541 = vand.u32 %v540, 4294901760
        %542 = vmatpush1.xpose.msra.mxu0 %v541
        %543 = vmatprep.subr.mxu0 0.0
        %v544 = vand.u32 %v365, 4294901760
        %v545 = vsub.f32 %v365, %v544
        %v546 = vand.u32 %v545, 4294901760
        %v547 = vsub.f32 %v545, %v546
        %v548 = vand.u32 %v547, 4294901760
        %549 = vmatpush1.xpose.msra.mxu0 %v548
        %550 = vmatprep.subr.mxu0 0.0
        %v551 = vand.u32 %v368, 4294901760
        %v552 = vsub.f32 %v368, %v551
        %v553 = vand.u32 %v552, 4294901760
        %v554 = vsub.f32 %v552, %v553
        %v555 = vand.u32 %v554, 4294901760
        %556 = vmatpush1.xpose.msra.mxu0 %v555
        %557 = vmatprep.subr.mxu0 0.0
        %v558 = vand.u32 %v371, 4294901760
        %v559 = vsub.f32 %v371, %v558
        %v560 = vand.u32 %v559, 4294901760
        %v561 = vsub.f32 %v559, %v560
        %v562 = vand.u32 %v561, 4294901760
        %563 = vmatpush1.xpose.msra.mxu0 %v562
        %564 = vmatprep.subr.mxu0 0.0
        %v565 = vand.u32 %v374, 4294901760
        %v566 = vsub.f32 %v374, %v565
        %v567 = vand.u32 %v566, 4294901760
        %v568 = vsub.f32 %v566, %v567
        %v569 = vand.u32 %v568, 4294901760
        %570 = vmatpush1.xpose.msra.mxu0 %v569
        %571 = vmatprep.subr.mxu0 0.0
        %v572 = vand.u32 %v377, 4294901760
        %v573 = vsub.f32 %v377, %v572
        %v574 = vand.u32 %v573, 4294901760
        %v575 = vsub.f32 %v573, %v574
        %v576 = vand.u32 %v575, 4294901760
        %577 = vmatpush1.xpose.msra.mxu0 %v576
        %578 = vmatprep.subr.mxu0 0.0
        %v579 = vand.u32 %v380, 4294901760
        %v580 = vsub.f32 %v380, %v579
        %v581 = vand.u32 %v580, 4294901760
        %v582 = vsub.f32 %v580, %v581
        %v583 = vand.u32 %v582, 4294901760
        %584 = vmatpush1.xpose.msra.mxu0 %v583
        %585 = vmatprep.subr.mxu0 0.0
        %586 = vmatpush1.xpose.msra.mxu0 0.0
        %587 = vmatprep.subr.mxu0 0.0
        %588 = vmatpush1.xpose.msra.mxu0 0.0
        %589 = vmatprep.subr.mxu0 0.0
        %590 = vmatpush1.xpose.msra.mxu0 0.0
        %591 = vmatprep.subr.mxu0 0.0
        %592 = vmatpush1.xpose.msra.mxu0 0.0
        %593 = vmatprep.subr.mxu0 0.0
        %594 = vmatpush1.xpose.msra.mxu0 0.0
        %595 = vmatprep.subr.mxu0 0.0
        %596 = vmatpush1.xpose.msra.mxu0 0.0
        %597 = vmatprep.subr.mxu0 0.0
        %598 = vmatpush1.xpose.msra.mxu0 0.0
        %599 = vmatprep.subr.mxu0 0.0
        %600 = vmatpush1.xpose.msra.mxu0 0.0
        %601 = vmatprep.subr.mxu0 0.0
        %602 = vmatpush1.xpose.msra.mxu0 0.0
        %603 = vmatprep.subr.mxu0 0.0
        %604 = vmatpush1.xpose.msra.mxu0 0.0
        %605 = vmatprep.subr.mxu0 0.0
        %606 = vmatpush1.xpose.msra.mxu0 0.0
        %607 = vmatprep.subr.mxu0 0.0
        %608 = vmatpush1.xpose.msra.mxu0 0.0
        %609 = vmatprep.subr.mxu0 0.0
        %610 = vmatpush1.xpose.msra.mxu0 0.0
        %611 = vmatprep.subr.mxu0 0.0
        %612 = vmatpush1.xpose.msra.mxu0 0.0
        %613 = vmatprep.subr.mxu0 0.0
        %614 = vmatpush1.xpose.msra.mxu0 0.0
        %615 = vmatprep.subr.mxu0 0.0
        %616 = vmatpush1.xpose.msra.mxu0 0.0
        %617 = vmatprep.mubr.f32.mxu0 0.0
        %v618 = vand.u32 %v332, 4294901760
        %619 = vmatmul.mubr.f32.gmra.mrb[0].mxu0 %v618
        %v620 = vpop.f32.mrb[0].mxu0
        %v621 = vadd.f32 %v470, %v620
        %v622 = vpop.f32.mrb[0].mxu0
        %623 = vdwg.mxu0
        %624 = vmatprep.subr.mxu0 0.0
        %v625 = vand.u32 %v335, 4294901760
        %v626 = vsub.f32 %v335, %v625
        %627 = vmatpush1.xpose.msra.mxu0 %v626
        %628 = vmatprep.subr.mxu0 0.0
        %v629 = vand.u32 %v338, 4294901760
        %v630 = vsub.f32 %v338, %v629
        %631 = vmatpush1.xpose.msra.mxu0 %v630
        %632 = vmatprep.subr.mxu0 0.0
        %v633 = vand.u32 %v341, 4294901760
        %v634 = vsub.f32 %v341, %v633
        %635 = vmatpush1.xpose.msra.mxu0 %v634
        %636 = vmatprep.subr.mxu0 0.0
        %v637 = vand.u32 %v344, 4294901760
        %v638 = vsub.f32 %v344, %v637
        %639 = vmatpush1.xpose.msra.mxu0 %v638
        %640 = vmatprep.subr.mxu0 0.0
        %v641 = vand.u32 %v347, 4294901760
        %v642 = vsub.f32 %v347, %v641
        %643 = vmatpush1.xpose.msra.mxu0 %v642
        %644 = vmatprep.subr.mxu0 0.0
        %v645 = vand.u32 %v350, 4294901760
        %v646 = vsub.f32 %v350, %v645
        %647 = vmatpush1.xpose.msra.mxu0 %v646
        %648 = vmatprep.subr.mxu0 0.0
        %v649 = vand.u32 %v353, 4294901760
        %v650 = vsub.f32 %v353, %v649
        %651 = vmatpush1.xpose.msra.mxu0 %v650
        %652 = vmatprep.subr.mxu0 0.0
        %v653 = vand.u32 %v356, 4294901760
        %v654 = vsub.f32 %v356, %v653
        %655 = vmatpush1.xpose.msra.mxu0 %v654
        %656 = vmatprep.subr.mxu0 0.0
        %v657 = vand.u32 %v359, 4294901760
        %v658 = vsub.f32 %v359, %v657
        %659 = vmatpush1.xpose.msra.mxu0 %v658
        %660 = vmatprep.subr.mxu0 0.0
        %v661 = vand.u32 %v362, 4294901760
        %v662 = vsub.f32 %v362, %v661
        %663 = vmatpush1.xpose.msra.mxu0 %v662
        %664 = vmatprep.subr.mxu0 0.0
        %v665 = vand.u32 %v365, 4294901760
        %v666 = vsub.f32 %v365, %v665
        %667 = vmatpush1.xpose.msra.mxu0 %v666
        %668 = vmatprep.subr.mxu0 0.0
        %v669 = vand.u32 %v368, 4294901760
        %v670 = vsub.f32 %v368, %v669
        %671 = vmatpush1.xpose.msra.mxu0 %v670
        %672 = vmatprep.subr.mxu0 0.0
        %v673 = vand.u32 %v371, 4294901760
        %v674 = vsub.f32 %v371, %v673
        %675 = vmatpush1.xpose.msra.mxu0 %v674
        %676 = vmatprep.subr.mxu0 0.0
        %v677 = vand.u32 %v374, 4294901760
        %v678 = vsub.f32 %v374, %v677
        %679 = vmatpush1.xpose.msra.mxu0 %v678
        %680 = vmatprep.subr.mxu0 0.0
        %v681 = vand.u32 %v377, 4294901760
        %v682 = vsub.f32 %v377, %v681
        %683 = vmatpush1.xpose.msra.mxu0 %v682
        %684 = vmatprep.subr.mxu0 0.0
        %v685 = vand.u32 %v380, 4294901760
        %v686 = vsub.f32 %v380, %v685
        %687 = vmatpush1.xpose.msra.mxu0 %v686
        %688 = vmatprep.subr.mxu0 0.0
        %689 = vmatpush1.xpose.msra.mxu0 0.0
        %690 = vmatprep.subr.mxu0 0.0
        %691 = vmatpush1.xpose.msra.mxu0 0.0
        %692 = vmatprep.subr.mxu0 0.0
        %693 = vmatpush1.xpose.msra.mxu0 0.0
        %694 = vmatprep.subr.mxu0 0.0
        %695 = vmatpush1.xpose.msra.mxu0 0.0
        %696 = vmatprep.subr.mxu0 0.0
        %697 = vmatpush1.xpose.msra.mxu0 0.0
        %698 = vmatprep.subr.mxu0 0.0
        %699 = vmatpush1.xpose.msra.mxu0 0.0
        %700 = vmatprep.subr.mxu0 0.0
        %701 = vmatpush1.xpose.msra.mxu0 0.0
        %702 = vmatprep.subr.mxu0 0.0
        %703 = vmatpush1.xpose.msra.mxu0 0.0
        %704 = vmatprep.subr.mxu0 0.0
        %705 = vmatpush1.xpose.msra.mxu0 0.0
        %706 = vmatprep.subr.mxu0 0.0
        %707 = vmatpush1.xpose.msra.mxu0 0.0
        %708 = vmatprep.subr.mxu0 0.0
        %709 = vmatpush1.xpose.msra.mxu0 0.0
        %710 = vmatprep.subr.mxu0 0.0
        %711 = vmatpush1.xpose.msra.mxu0 0.0
        %712 = vmatprep.subr.mxu0 0.0
        %713 = vmatpush1.xpose.msra.mxu0 0.0
        %714 = vmatprep.subr.mxu0 0.0
        %715 = vmatpush1.xpose.msra.mxu0 0.0
        %716 = vmatprep.subr.mxu0 0.0
        %717 = vmatpush1.xpose.msra.mxu0 0.0
        %718 = vmatprep.subr.mxu0 0.0
        %719 = vmatpush1.xpose.msra.mxu0 0.0
        %720 = vmatprep.mubr.f32.mxu0 0.0
        %v721 = vand.u32 %v332, 4294901760
        %v722 = vsub.f32 %v332, %v721
        %723 = vmatmul.mubr.f32.gmra.mrb[0].mxu0 %v722
        %v724 = vpop.f32.mrb[0].mxu0
        %v725 = vadd.f32 %v621, %v724
        %v726 = vpop.f32.mrb[0].mxu0
        %727 = vdwg.mxu0
        %728 = vmatprep.subr.mxu0 0.0
        %v729 = vand.u32 %v335, 4294901760
        %730 = vmatpush1.xpose.msra.mxu0 %v729
        %731 = vmatprep.subr.mxu0 0.0
        %v732 = vand.u32 %v338, 4294901760
        %733 = vmatpush1.xpose.msra.mxu0 %v732
        %734 = vmatprep.subr.mxu0 0.0
        %v735 = vand.u32 %v341, 4294901760
        %736 = vmatpush1.xpose.msra.mxu0 %v735
        %737 = vmatprep.subr.mxu0 0.0
        %v738 = vand.u32 %v344, 4294901760
        %739 = vmatpush1.xpose.msra.mxu0 %v738
        %740 = vmatprep.subr.mxu0 0.0
        %v741 = vand.u32 %v347, 4294901760
        %742 = vmatpush1.xpose.msra.mxu0 %v741
        %743 = vmatprep.subr.mxu0 0.0
        %v744 = vand.u32 %v350, 4294901760
        %745 = vmatpush1.xpose.msra.mxu0 %v744
        %746 = vmatprep.subr.mxu0 0.0
        %v747 = vand.u32 %v353, 4294901760
        %748 = vmatpush1.xpose.msra.mxu0 %v747
        %749 = vmatprep.subr.mxu0 0.0
        %v750 = vand.u32 %v356, 4294901760
        %751 = vmatpush1.xpose.msra.mxu0 %v750
        %752 = vmatprep.subr.mxu0 0.0
        %v753 = vand.u32 %v359, 4294901760
        %754 = vmatpush1.xpose.msra.mxu0 %v753
        %755 = vmatprep.subr.mxu0 0.0
        %v756 = vand.u32 %v362, 4294901760
        %757 = vmatpush1.xpose.msra.mxu0 %v756
        %758 = vmatprep.subr.mxu0 0.0
        %v759 = vand.u32 %v365, 4294901760
        %760 = vmatpush1.xpose.msra.mxu0 %v759
        %761 = vmatprep.subr.mxu0 0.0
        %v762 = vand.u32 %v368, 4294901760
        %763 = vmatpush1.xpose.msra.mxu0 %v762
        %764 = vmatprep.subr.mxu0 0.0
        %v765 = vand.u32 %v371, 4294901760
        %766 = vmatpush1.xpose.msra.mxu0 %v765
        %767 = vmatprep.subr.mxu0 0.0
        %v768 = vand.u32 %v374, 4294901760
        %769 = vmatpush1.xpose.msra.mxu0 %v768
        %770 = vmatprep.subr.mxu0 0.0
        %v771 = vand.u32 %v377, 4294901760
        %772 = vmatpush1.xpose.msra.mxu0 %v771
        %773 = vmatprep.subr.mxu0 0.0
        %v774 = vand.u32 %v380, 4294901760
        %775 = vmatpush1.xpose.msra.mxu0 %v774
        %776 = vmatprep.subr.mxu0 0.0
        %777 = vmatpush1.xpose.msra.mxu0 0.0
        %778 = vmatprep.subr.mxu0 0.0
        %779 = vmatpush1.xpose.msra.mxu0 0.0
        %780 = vmatprep.subr.mxu0 0.0
        %781 = vmatpush1.xpose.msra.mxu0 0.0
        %782 = vmatprep.subr.mxu0 0.0
        %783 = vmatpush1.xpose.msra.mxu0 0.0
        %784 = vmatprep.subr.mxu0 0.0
        %785 = vmatpush1.xpose.msra.mxu0 0.0
        %786 = vmatprep.subr.mxu0 0.0
        %787 = vmatpush1.xpose.msra.mxu0 0.0
        %788 = vmatprep.subr.mxu0 0.0
        %789 = vmatpush1.xpose.msra.mxu0 0.0
        %790 = vmatprep.subr.mxu0 0.0
        %791 = vmatpush1.xpose.msra.mxu0 0.0
        %792 = vmatprep.subr.mxu0 0.0
        %793 = vmatpush1.xpose.msra.mxu0 0.0
        %794 = vmatprep.subr.mxu0 0.0
        %795 = vmatpush1.xpose.msra.mxu0 0.0
        %796 = vmatprep.subr.mxu0 0.0
        %797 = vmatpush1.xpose.msra.mxu0 0.0
        %798 = vmatprep.subr.mxu0 0.0
        %799 = vmatpush1.xpose.msra.mxu0 0.0
        %800 = vmatprep.subr.mxu0 0.0
        %801 = vmatpush1.xpose.msra.mxu0 0.0
        %802 = vmatprep.subr.mxu0 0.0
        %803 = vmatpush1.xpose.msra.mxu0 0.0
        %804 = vmatprep.subr.mxu0 0.0
        %805 = vmatpush1.xpose.msra.mxu0 0.0
        %806 = vmatprep.subr.mxu0 0.0
        %807 = vmatpush1.xpose.msra.mxu0 0.0
        %808 = vmatprep.mubr.f32.mxu0 0.0
        %v809 = vand.u32 %v332, 4294901760
        %v810 = vsub.f32 %v332, %v809
        %v811 = vand.u32 %v810, 4294901760
        %812 = vmatmul.mubr.f32.gmra.mrb[0].mxu0 %v811
        %v813 = vpop.f32.mrb[0].mxu0
        %v814 = vadd.f32 %v725, %v813
        %v815 = vpop.f32.mrb[0].mxu0
        %816 = vdwg.mxu0
        %817 = vmatprep.subr.mxu0 0.0
        %v818 = vand.u32 %v335, 4294901760
        %v819 = vsub.f32 %v335, %v818
        %v820 = vand.u32 %v819, 4294901760
        %821 = vmatpush1.xpose.msra.mxu0 %v820
        %822 = vmatprep.subr.mxu0 0.0
        %v823 = vand.u32 %v338, 4294901760
        %v824 = vsub.f32 %v338, %v823
        %v825 = vand.u32 %v824, 4294901760
        %826 = vmatpush1.xpose.msra.mxu0 %v825
        %827 = vmatprep.subr.mxu0 0.0
        %v828 = vand.u32 %v341, 4294901760
        %v829 = vsub.f32 %v341, %v828
        %v830 = vand.u32 %v829, 4294901760
        %831 = vmatpush1.xpose.msra.mxu0 %v830
        %832 = vmatprep.subr.mxu0 0.0
        %v833 = vand.u32 %v344, 4294901760
        %v834 = vsub.f32 %v344, %v833
        %v835 = vand.u32 %v834, 4294901760
        %836 = vmatpush1.xpose.msra.mxu0 %v835
        %837 = vmatprep.subr.mxu0 0.0
        %v838 = vand.u32 %v347, 4294901760
        %v839 = vsub.f32 %v347, %v838
        %v840 = vand.u32 %v839, 4294901760
        %841 = vmatpush1.xpose.msra.mxu0 %v840
        %842 = vmatprep.subr.mxu0 0.0
        %v843 = vand.u32 %v350, 4294901760
        %v844 = vsub.f32 %v350, %v843
        %v845 = vand.u32 %v844, 4294901760
        %846 = vmatpush1.xpose.msra.mxu0 %v845
        %847 = vmatprep.subr.mxu0 0.0
        %v848 = vand.u32 %v353, 4294901760
        %v849 = vsub.f32 %v353, %v848
        %v850 = vand.u32 %v849, 4294901760
        %851 = vmatpush1.xpose.msra.mxu0 %v850
        %852 = vmatprep.subr.mxu0 0.0
        %v853 = vand.u32 %v356, 4294901760
        %v854 = vsub.f32 %v356, %v853
        %v855 = vand.u32 %v854, 4294901760
        %856 = vmatpush1.xpose.msra.mxu0 %v855
        %857 = vmatprep.subr.mxu0 0.0
        %v858 = vand.u32 %v359, 4294901760
        %v859 = vsub.f32 %v359, %v858
        %v860 = vand.u32 %v859, 4294901760
        %861 = vmatpush1.xpose.msra.mxu0 %v860
        %862 = vmatprep.subr.mxu0 0.0
        %v863 = vand.u32 %v362, 4294901760
        %v864 = vsub.f32 %v362, %v863
        %v865 = vand.u32 %v864, 4294901760
        %866 = vmatpush1.xpose.msra.mxu0 %v865
        %867 = vmatprep.subr.mxu0 0.0
        %v868 = vand.u32 %v365, 4294901760
        %v869 = vsub.f32 %v365, %v868
        %v870 = vand.u32 %v869, 4294901760
        %871 = vmatpush1.xpose.msra.mxu0 %v870
        %872 = vmatprep.subr.mxu0 0.0
        %v873 = vand.u32 %v368, 4294901760
        %v874 = vsub.f32 %v368, %v873
        %v875 = vand.u32 %v874, 4294901760
        %876 = vmatpush1.xpose.msra.mxu0 %v875
        %877 = vmatprep.subr.mxu0 0.0
        %v878 = vand.u32 %v371, 4294901760
        %v879 = vsub.f32 %v371, %v878
        %v880 = vand.u32 %v879, 4294901760
        %881 = vmatpush1.xpose.msra.mxu0 %v880
        %882 = vmatprep.subr.mxu0 0.0
        %v883 = vand.u32 %v374, 4294901760
        %v884 = vsub.f32 %v374, %v883
        %v885 = vand.u32 %v884, 4294901760
        %886 = vmatpush1.xpose.msra.mxu0 %v885
        %887 = vmatprep.subr.mxu0 0.0
        %v888 = vand.u32 %v377, 4294901760
        %v889 = vsub.f32 %v377, %v888
        %v890 = vand.u32 %v889, 4294901760
        %891 = vmatpush1.xpose.msra.mxu0 %v890
        %892 = vmatprep.subr.mxu0 0.0
        %v893 = vand.u32 %v380, 4294901760
        %v894 = vsub.f32 %v380, %v893
        %v895 = vand.u32 %v894, 4294901760
        %896 = vmatpush1.xpose.msra.mxu0 %v895
        %897 = vmatprep.subr.mxu0 0.0
        %898 = vmatpush1.xpose.msra.mxu0 0.0
        %899 = vmatprep.subr.mxu0 0.0
        %900 = vmatpush1.xpose.msra.mxu0 0.0
        %901 = vmatprep.subr.mxu0 0.0
        %902 = vmatpush1.xpose.msra.mxu0 0.0
        %903 = vmatprep.subr.mxu0 0.0
        %904 = vmatpush1.xpose.msra.mxu0 0.0
        %905 = vmatprep.subr.mxu0 0.0
        %906 = vmatpush1.xpose.msra.mxu0 0.0
        %907 = vmatprep.subr.mxu0 0.0
        %908 = vmatpush1.xpose.msra.mxu0 0.0
        %909 = vmatprep.subr.mxu0 0.0
        %910 = vmatpush1.xpose.msra.mxu0 0.0
        %911 = vmatprep.subr.mxu0 0.0
        %912 = vmatpush1.xpose.msra.mxu0 0.0
        %913 = vmatprep.subr.mxu0 0.0
        %914 = vmatpush1.xpose.msra.mxu0 0.0
        %915 = vmatprep.subr.mxu0 0.0
        %916 = vmatpush1.xpose.msra.mxu0 0.0
        %917 = vmatprep.subr.mxu0 0.0
        %918 = vmatpush1.xpose.msra.mxu0 0.0
        %919 = vmatprep.subr.mxu0 0.0
        %920 = vmatpush1.xpose.msra.mxu0 0.0
        %921 = vmatprep.subr.mxu0 0.0
        %922 = vmatpush1.xpose.msra.mxu0 0.0
        %923 = vmatprep.subr.mxu0 0.0
        %924 = vmatpush1.xpose.msra.mxu0 0.0
        %925 = vmatprep.subr.mxu0 0.0
        %926 = vmatpush1.xpose.msra.mxu0 0.0
        %927 = vmatprep.subr.mxu0 0.0
        %928 = vmatpush1.xpose.msra.mxu0 0.0
        %929 = vmatprep.mubr.f32.mxu0 0.0
        %v930 = vand.u32 %v332, 4294901760
        %931 = vmatmul.mubr.f32.gmra.mrb[0].mxu0 %v930
        %v932 = vpop.f32.mrb[0].mxu0
        %v933 = vadd.f32 %v814, %v932
        %v934 = vpop.f32.mrb[0].mxu0
        %935 = vdwg.mxu0
        %936 = vmatprep.subr.mxu0 0.0
        %v937 = vand.u32 %v335, 4294901760
        %938 = vmatpush1.xpose.msra.mxu0 %v937
        %939 = vmatprep.subr.mxu0 0.0
        %v940 = vand.u32 %v338, 4294901760
        %941 = vmatpush1.xpose.msra.mxu0 %v940
        %942 = vmatprep.subr.mxu0 0.0
        %v943 = vand.u32 %v341, 4294901760
        %944 = vmatpush1.xpose.msra.mxu0 %v943
        %945 = vmatprep.subr.mxu0 0.0
        %v946 = vand.u32 %v344, 4294901760
        %947 = vmatpush1.xpose.msra.mxu0 %v946
        %948 = vmatprep.subr.mxu0 0.0
        %v949 = vand.u32 %v347, 4294901760
        %950 = vmatpush1.xpose.msra.mxu0 %v949
        %951 = vmatprep.subr.mxu0 0.0
        %v952 = vand.u32 %v350, 4294901760
        %953 = vmatpush1.xpose.msra.mxu0 %v952
        %954 = vmatprep.subr.mxu0 0.0
        %v955 = vand.u32 %v353, 4294901760
        %956 = vmatpush1.xpose.msra.mxu0 %v955
        %957 = vmatprep.subr.mxu0 0.0
        %v958 = vand.u32 %v356, 4294901760
        %959 = vmatpush1.xpose.msra.mxu0 %v958
        %960 = vmatprep.subr.mxu0 0.0
        %v961 = vand.u32 %v359, 4294901760
        %962 = vmatpush1.xpose.msra.mxu0 %v961
        %963 = vmatprep.subr.mxu0 0.0
        %v964 = vand.u32 %v362, 4294901760
        %965 = vmatpush1.xpose.msra.mxu0 %v964
        %966 = vmatprep.subr.mxu0 0.0
        %v967 = vand.u32 %v365, 4294901760
        %968 = vmatpush1.xpose.msra.mxu0 %v967
        %969 = vmatprep.subr.mxu0 0.0
        %v970 = vand.u32 %v368, 4294901760
        %971 = vmatpush1.xpose.msra.mxu0 %v970
        %972 = vmatprep.subr.mxu0 0.0
        %v973 = vand.u32 %v371, 4294901760
        %974 = vmatpush1.xpose.msra.mxu0 %v973
        %975 = vmatprep.subr.mxu0 0.0
        %v976 = vand.u32 %v374, 4294901760
        %977 = vmatpush1.xpose.msra.mxu0 %v976
        %978 = vmatprep.subr.mxu0 0.0
        %v979 = vand.u32 %v377, 4294901760
        %980 = vmatpush1.xpose.msra.mxu0 %v979
        %981 = vmatprep.subr.mxu0 0.0
        %v982 = vand.u32 %v380, 4294901760
        %983 = vmatpush1.xpose.msra.mxu0 %v982
        %984 = vmatprep.subr.mxu0 0.0
        %985 = vmatpush1.xpose.msra.mxu0 0.0
        %986 = vmatprep.subr.mxu0 0.0
        %987 = vmatpush1.xpose.msra.mxu0 0.0
        %988 = vmatprep.subr.mxu0 0.0
        %989 = vmatpush1.xpose.msra.mxu0 0.0
        %990 = vmatprep.subr.mxu0 0.0
        %991 = vmatpush1.xpose.msra.mxu0 0.0
        %992 = vmatprep.subr.mxu0 0.0
        %993 = vmatpush1.xpose.msra.mxu0 0.0
        %994 = vmatprep.subr.mxu0 0.0
        %995 = vmatpush1.xpose.msra.mxu0 0.0
        %996 = vmatprep.subr.mxu0 0.0
        %997 = vmatpush1.xpose.msra.mxu0 0.0
        %998 = vmatprep.subr.mxu0 0.0
        %999 = vmatpush1.xpose.msra.mxu0 0.0
        %1000 = vmatprep.subr.mxu0 0.0
        %1001 = vmatpush1.xpose.msra.mxu0 0.0
        %1002 = vmatprep.subr.mxu0 0.0
        %1003 = vmatpush1.xpose.msra.mxu0 0.0
        %1004 = vmatprep.subr.mxu0 0.0
        %1005 = vmatpush1.xpose.msra.mxu0 0.0
        %1006 = vmatprep.subr.mxu0 0.0
        %1007 = vmatpush1.xpose.msra.mxu0 0.0
        %1008 = vmatprep.subr.mxu0 0.0
        %1009 = vmatpush1.xpose.msra.mxu0 0.0
        %1010 = vmatprep.subr.mxu0 0.0
        %1011 = vmatpush1.xpose.msra.mxu0 0.0
        %1012 = vmatprep.subr.mxu0 0.0
        %1013 = vmatpush1.xpose.msra.mxu0 0.0
        %1014 = vmatprep.subr.mxu0 0.0
        %1015 = vmatpush1.xpose.msra.mxu0 0.0
        %1016 = vmatprep.mubr.f32.mxu0 0.0
        %v1017 = vand.u32 %v332, 4294901760
        %1018 = vmatmul.mubr.f32.gmra.mrb[0].mxu0 %v1017
        %v1019 = vpop.f32.mrb[0].mxu0
        %v1020 = vadd.f32 %v933, %v1019
        %v1021 = vpop.f32.mrb[0].mxu0
        %1022 = vdwg.mxu0
        %v1023 = vld [vmem:[%s307] sm:$0xff]
        %v1024 = vld [vmem:[%s310] sm:$0x1]
        %1026 = vset.pattern.permute.xlu0 0
        %1027 = vperm.xlu0 %1026, %v1023
        %v1028 = vpop.permute.xlu0 %1027
        %v1031 = vlaneseq
        %v1032 = vshrl.u32 %v1031, 7
        %v1033 = vsub.s32 0, %v1032
        %v1034 = vrot.slane %v1024, %v1033
        %v1036 = vadd.f32 %v1028, %v1034
        %v1037 = vmul.f32 %v1020, 2.0
        %v1038 = vsub.f32 %v1036, %v1037
        %v1039 = vmax.f32 %v1038, 1e-30
        %v1040 = vrsqrt.pop %v1039
        %v1041 = vmul.f32 %v1039, %v1040
        %vm1042 = vcmp.eq.f32.partialorder %v1039, inf
        %v1043 = vsel %vm1042, %v1039, %v1041
        %vm1044 = vcmp.eq.f32.partialorder %v1039, 0.0
        %v1045 = vand.u32 %v1039, 2147483648
        %v1046 = vsel %vm1044, %v1045, %v1043
        %v1047 = vstv %s311
        %v1048 = vmul.f32 %v1046, %v1047
        %v1049 = vmul.f32 %v1048, 1.442695
        %v1050 = vpow.pop %v1049
        %v1051 = vsub.f32 1.0, %v1048
        %v1052 = vmul.f32 %v1050, %v1051
        %v1053 = vstv %s312
        %v1054 = vmul.f32 %v1052, %v1053
        %1055 = vst [vmem:[%s289] sm:$0xff] %v1054
        %s1056 = sand.u32 %s167, 1
        %s1057 = scalar_lea.sflag [#allocation3], %s1056
        %s1058 = sand.u32 %s167, 1
        %s1059 = smul.addr %s1058, 8
        %s1060 = scalar_lea.vmem [#allocation5], %s1059
        // Predicated region
        $region45: #{tpu_custom_call.1} parent=39 // pred_check
          %p1061 = pneg %p177
        $region46: #{tpu_custom_call.1} parent=39 // pred_check_branch
          %1063 = sbr.rel (%p1061) target = $region48
        $region47: #{tpu_custom_call.1} parent=39 // pred_region
          %s1065 = ssub.s32 128, 128
          %1066 = vsyncadd %s1057, %s1065
          %s1067 = sadd.s32 %s25, %s24
          %s1068 = smul.addr %s1067, 128
          %s1069 = scalar_lea.hbm %s5, %s1068
          %s1071 = sshll.u32 %s1060, 4
          %s1072 = int_to_ptr.vmem [resolvable:$true] %s1071
          %1074 = dma.vmem_to_hbm [thread:$0]  %s1072, 128, %s1069, %s1057
        $region48: #{tpu_custom_call.1} parent=39 // pred_fallthru
          _
      $region40: #{tpu_custom_call.1} parent=5 // pred_fallthru
        _
      %p1075 = scmp.le.s32.totalorder 2, %s15
      // Predicated region
      $region49: #{tpu_custom_call.1} parent=5 // pred_check
        %p1076 = pneg %p1075
      $region50: #{tpu_custom_call.1} parent=5 // pred_check_branch
        %1078 = sbr.rel (%p1076) target = $region52
      $region51: #{tpu_custom_call.1} parent=5 // pred_region
        %s1079 = ssub.s32 %s15, 2
        // Predicated region
        $region53: #{tpu_custom_call.1} parent=51 // pred_check
          %p1080 = pneg %p183
        $region54: #{tpu_custom_call.1} parent=51 // pred_check_branch
          %1082 = sbr.rel (%p1080) target = $region56
        $region55: #{tpu_custom_call.1} parent=51 // pred_region
          %s1083 = sand.u32 %s168, 1
          %s1084 = scalar_lea.sflag [#allocation3], %s1083
          %s1085 = sand.u32 %s168, 1
          %s1086 = smul.addr %s1085, 8
          %s1087 = scalar_lea.vmem [#allocation5], %s1086
          %1088 = dma.done %s1084, 128
        $region56: #{tpu_custom_call.1} parent=51 // pred_fallthru
          _
      $region52: #{tpu_custom_call.1} parent=5 // pred_fallthru
        _
    $region6: #{tpu_custom_call.1} parent=1 // loop_footer
      %s19 = sadd.s32 1, %s15
    $region7: #{tpu_custom_call.1} parent=1 // loop_footer_branch
      %14 = sbr.rel target = $region3
    $region8: #{tpu_custom_call.1} parent=1 // loop_exit
      _
    %1089 = vsyncpa [#allocation3], 1
    %s1090 = scalar_lea.sflag [#allocation3], 1
    %1091 = vsyncpa %s1090, 1
    %1092 = vsyncpa [#allocation4], 1
    %s1093 = scalar_lea.sflag [#allocation4], 1
    %1094 = vsyncpa %s1093, 1

</llo_original>
